<compile_context>
chip_gen: v6e
topology: v6e:2x2x1
jax: 0.10.0
libtpu: 0.0.40
codegen_flags: <defaults>
</compile_context>

<pallas_src>
import functools
from typing import NamedTuple

import jax
import jax.numpy as jnp
from jax import lax
from jax.experimental import pallas as pl
from jax.experimental.pallas import tpu as pltpu


def _round_up(x, m):
    return ((x + m - 1) // m) * m


def _lm_logprob_kernel(h_ref, w_ref, labels_ref, mask_ref, out_ref,
                       m_sc, l_sc, sel_sc, *, vocab_size, tv, mask_last_tile):
    # Grid: (vocab tiles [outer, "arbitrary"], M tiles [inner, "parallel"]).
    # h_ref:      (TM, D)   bf16   (streamed per inner step)
    # w_ref:      (D, TV)   bf16   (resident across the inner M sweep)
    # labels_ref: (TM, 1)   int32
    # mask_ref:   (TM, 1)   f32
    # out_ref:    (TM, 1)   f32
    # m_sc/l_sc/sel_sc: (NM, TM, 1) f32 online-softmax state, indexed by i.
    j = pl.program_id(0)          # vocab tile (outer)
    i = pl.program_id(1)          # M tile (inner)

    @pl.when(j == 0)
    def _():
        m_sc[i] = jnp.full(m_sc.shape[1:], -jnp.inf, dtype=m_sc.dtype)
        l_sc[i] = jnp.zeros(l_sc.shape[1:], dtype=l_sc.dtype)
        sel_sc[i] = jnp.zeros(sel_sc.shape[1:], dtype=sel_sc.dtype)

    # MXU: bf16 x bf16 -> f32 logits tile.
    logits = jnp.dot(h_ref[...], w_ref[...],
                     preferred_element_type=jnp.float32)          # (TM, TV)

    local_ids = lax.broadcasted_iota(jnp.int32, (1, tv), 1)       # (1, TV)

    if mask_last_tile:
        # Padded vocab columns exist only in the last vocab tile; one select
        # pass keeps them out of the max / sum-exp. Compiled in only when
        # V % tv != 0 (statically known in the wrapper).
        logits = jnp.where(j * tv + local_ids < vocab_size, logits,
                           jnp.float32(-1e30))

    # Online log-softmax statistics (f32).
    m_prev = m_sc[i]
    m_new = jnp.maximum(m_prev, jnp.max(logits, axis=-1, keepdims=True))
    alpha = jnp.exp(m_prev - m_new)
    l_new = alpha * l_sc[i] + jnp.sum(jnp.exp(logits - m_new),
                                      axis=-1, keepdims=True)
    m_sc[i] = m_new
    l_sc[i] = l_new

    # Tile-local label select: compare the (1, TV) iota with (labels - j*tv);
    # no (TM, TV) int32 iota materialization.
    rel = labels_ref[...] - j * tv                                # (TM, 1)
    sel_new = sel_sc[i] + jnp.sum(jnp.where(local_ids == rel, logits, 0.0),
                                  axis=-1, keepdims=True)
    sel_sc[i] = sel_new

    # The output block index changes every inner step (forcing a writeback),
    # so write the current partial value unconditionally; the final vocab
    # pass overwrites every block with the correct masked log-prob.
    out_ref[...] = mask_ref[...] * (sel_new - m_new - jnp.log(l_new))


class PreparedLMHead(NamedTuple):
    w: jax.Array        # (D, v_pad) bf16, vocab padded to a multiple of tv
    vocab_size: int
    tv: int


def prepare_lm_head(w_lm, *, tv=2048):
    """Cast + vocab-pad the LM head ONCE at weight-load time (not per call)."""
    _, V = w_lm.shape
    tv = max(128, (tv // 128) * 128)
    tv = min(tv, _round_up(V, 128))
    v_pad = _round_up(V, tv)
    w = w_lm.astype(jnp.bfloat16)
    if v_pad != V:
        w = jnp.pad(w, ((0, 0), (0, v_pad - V)))
    return PreparedLMHead(w=w, vocab_size=V, tv=tv)


def sentence_logprobs(hidden, lm_head, labels, label_att_mask, *, tm=512):
    """hidden: [B, S, D] f32, lm_head: PreparedLMHead, labels: [B, S] int,
    label_att_mask: [B, S] float -> [B] f32 sentence log-probs."""
    B, S, D = hidden.shape
    V, tv, w = lm_head.vocab_size, lm_head.tv, lm_head.w
    v_pad = w.shape[1]
    M = B * S

    # M tile: as large as M allows (keeps the MXU fed); when M is large
    # enough, keep >= 2 tiles so the "parallel" M axis can feed both v7x TCs.
    tm = max(8, (min(tm, 1024) // 8) * 8)
    m_r = _round_up(M, 8)
    if m_r <= tm:
        tm = m_r
        if m_r >= 512:
            tm = _round_up(m_r // 2, 128)
    m_pad = _round_up(M, tm)
    nm = m_pad // tm
    nv = v_pad // tv

    # Fold B*S into the matmul M dimension; bf16 operands for the MXU.
    h2 = hidden.reshape(M, D).astype(jnp.bfloat16)
    labels2 = labels.reshape(M).astype(jnp.int32)
    mask2 = label_att_mask.reshape(M).astype(jnp.float32)
    if m_pad != M:
        h2 = jnp.pad(h2, ((0, m_pad - M), (0, 0)))
        labels2 = jnp.pad(labels2, (0, m_pad - M))
        mask2 = jnp.pad(mask2, (0, m_pad - M))
    labels2 = labels2[:, None]   # (m_pad, 1)
    mask2 = mask2[:, None]       # (m_pad, 1)

    kernel = functools.partial(_lm_logprob_kernel, vocab_size=V, tv=tv,
                               mask_last_tile=(v_pad != V))

    # VMEM budget: double-buffered streamed tiles + logits working set +
    # resident online-softmax state (lane-padded), clamped for v7x (64 MiB).
    lane = 128
    est = (2 * D * tv * 2            # W tile (bf16) x2 buffers
           + 2 * tm * D * 2          # hidden tile (bf16) x2 buffers
           + 2 * 3 * tm * lane * 4   # labels/mask/out (tm,1) lane-padded x2
           + tm * tv * 4             # f32 logits working set
           + 3 * m_pad * lane * 4    # online-softmax state scratch
           + (2 << 20))
    vmem_limit = int(min(48 * 1024 * 1024, max(32 * 1024 * 1024, 2 * est)))

    out = pl.pallas_call(
        kernel,
        out_shape=jax.ShapeDtypeStruct((m_pad, 1), jnp.float32),
        grid_spec=pltpu.PrefetchScalarGridSpec(
            num_scalar_prefetch=0,
            grid=(nv, nm),   # vocab outer (weight resident), M inner
            in_specs=[
                pl.BlockSpec((tm, D), lambda j, i: (i, 0)),   # hidden (streamed)
                pl.BlockSpec((D, tv), lambda j, i: (0, j)),   # LM-head tile (resident over i)
                pl.BlockSpec((tm, 1), lambda j, i: (i, 0)),   # labels
                pl.BlockSpec((tm, 1), lambda j, i: (i, 0)),   # mask
            ],
            out_specs=pl.BlockSpec((tm, 1), lambda j, i: (i, 0)),
            scratch_shapes=[
                pltpu.VMEM((nm, tm, 1), jnp.float32),  # running max m
                pltpu.VMEM((nm, tm, 1), jnp.float32),  # running sum-exp l
                pltpu.VMEM((nm, tm, 1), jnp.float32),  # selected label logit
            ],
        ),
        compiler_params=pltpu.CompilerParams(
            dimension_semantics=("arbitrary", "parallel"),
            vmem_limit_bytes=vmem_limit,
        ),
    )(h2, w, labels2, mask2)

    # Tiny per-sentence reduction over the sequence (mask already applied).
    per_pos = out[:M, 0].reshape(B, S)
    return jnp.sum(per_pos, axis=-1)


if __name__ == "__main__":
    # Small shapes consistent with the forward: batch=2, seq=8, hidden=32,
    # vocab=128 (stand-in for the T5 vocab).
    B, S, D, V = 2, 8, 32, 128

    key = jax.random.PRNGKey(0)
    k_emb, k_lm, k_ids, k_lbl, k_msk = jax.random.split(key, 5)

    # Deterministic stand-in parameters for the "T5": token embedding table
    # (produces decoder hidden states) and an LM-head projection.
    emb_table = jax.random.normal(k_emb, (V, D), dtype=jnp.float32) * 0.1
    w_lm = jax.random.normal(k_lm, (D, V), dtype=jnp.float32) * 0.1

    input_ids = jax.random.randint(k_ids, (B, S), 0, V, dtype=jnp.int32)
    labels = jax.random.randint(k_lbl, (B, S), 0, V, dtype=jnp.int32)
    label_att_mask = jax.random.bernoulli(k_msk, 0.8, (B, S)).astype(jnp.float32)

    # "t5(...).logits" stand-in: hidden = embedding(input_ids); the LM-head
    # matmul / log_softmax / gather / masked sum run inside the Pallas kernel.
    hidden = emb_table[input_ids]  # (B, S, D)

    # LM-head cast/pad happens once here (weight-load time), not per call.
    lm_head = prepare_lm_head(w_lm)

    out = sentence_logprobs(hidden, lm_head, labels, label_att_mask)
    out = jax.block_until_ready(out)

    # Pure-JAX reference of the module's post-logits math, using the same
    # bf16-rounded operands the kernel feeds to the MXU.
    h_b = hidden.astype(jnp.bfloat16).astype(jnp.float32)
    w_b = w_lm.astype(jnp.bfloat16).astype(jnp.float32)
    logits_ref = jnp.einsum("bsd,dv->bsv", h_b, w_b)
    log_probs_ref = jax.nn.log_softmax(logits_ref, axis=-1)
    selected_ref = jnp.take_along_axis(log_probs_ref, labels[..., None], axis=2)[..., 0]
    ref = jnp.sum(label_att_mask * selected_ref, axis=-1)

    assert out.shape == (B,)
    assert jnp.allclose(out, ref, atol=2e-3, rtol=2e-3), (out, ref)
    print("KERNEL_OK")
</pallas_src>

<mosaic_0001>
module attributes {stable_mosaic.version = 11 : i64} {
  func.func @_lm_logprob_kernel(%arg0: i32, %arg1: i32, %arg2: memref<16x32xbf16, #tpu.memory_space<vmem>>, %arg3: memref<32x128xbf16, #tpu.memory_space<vmem>>, %arg4: memref<16x1xi32, #tpu.memory_space<vmem>>, %arg5: memref<16x1xf32, #tpu.memory_space<vmem>>, %arg6: memref<16x1xf32, #tpu.memory_space<vmem>>, %arg7: memref<1x16x1xf32, #tpu.memory_space<vmem>>, %arg8: memref<1x16x1xf32, #tpu.memory_space<vmem>>, %arg9: memref<1x16x1xf32, #tpu.memory_space<vmem>>) attributes {dimension_semantics = [#tpu.dimension_semantics<arbitrary>, #tpu.dimension_semantics<parallel>], iteration_bounds = array<i64: 1, 1>, scalar_prefetch = 0 : i64, scratch_operands = 3 : i64, tpu.core_type = #tpu.core_type<tc>, window_params = [{transform_indices = @transform_0, window_bounds = array<i64: 16, 32>}, {transform_indices = @transform_1, window_bounds = array<i64: 32, 128>}, {transform_indices = @transform_2, window_bounds = array<i64: 16, 1>}, {transform_indices = @transform_3, window_bounds = array<i64: 16, 1>}, {transform_indices = @transform_4, window_bounds = array<i64: 16, 1>}]} {
    %c0_i32 = arith.constant 0 : i32
    %0 = arith.cmpi eq, %arg0, %c0_i32 : i32
    %1 = arith.extui %0 : i1 to i32
    %c0_i32_0 = arith.constant 0 : i32
    %2 = arith.cmpi ne, %1, %c0_i32_0 : i32
    scf.if %2 {
      %cst_26 = arith.constant 0xFF800000 : f32
      %58 = vector.broadcast %cst_26 : f32 to vector<16x1xf32>
      %59 = arith.index_cast %arg1 : i32 to index
      %c0_27 = arith.constant 0 : index
      %c0_28 = arith.constant 0 : index
      %60 = vector.load %arg7[%59, %c0_27, %c0_28] : memref<1x16x1xf32, #tpu.memory_space<vmem>>, vector<1x16x1xf32>
      %61 = vector.shape_cast %60 : vector<1x16x1xf32> to vector<16x1xf32>
      %62 = vector.shape_cast %58 : vector<16x1xf32> to vector<1x16x1xf32>
      tpu.vector_store %arg7[%59, %c0_27, %c0_28], %62 {strides = array<i32>} : memref<1x16x1xf32, #tpu.memory_space<vmem>>, vector<1x16x1xf32>,
      %cst_29 = arith.constant 0.000000e+00 : f32
      %63 = vector.broadcast %cst_29 : f32 to vector<16x1xf32>
      %64 = arith.index_cast %arg1 : i32 to index
      %c0_30 = arith.constant 0 : index
      %c0_31 = arith.constant 0 : index
      %65 = vector.load %arg8[%64, %c0_30, %c0_31] : memref<1x16x1xf32, #tpu.memory_space<vmem>>, vector<1x16x1xf32>
      %66 = vector.shape_cast %65 : vector<1x16x1xf32> to vector<16x1xf32>
      %67 = vector.shape_cast %63 : vector<16x1xf32> to vector<1x16x1xf32>
      tpu.vector_store %arg8[%64, %c0_30, %c0_31], %67 {strides = array<i32>} : memref<1x16x1xf32, #tpu.memory_space<vmem>>, vector<1x16x1xf32>,
      %cst_32 = arith.constant 0.000000e+00 : f32
      %68 = vector.broadcast %cst_32 : f32 to vector<16x1xf32>
      %69 = arith.index_cast %arg1 : i32 to index
      %c0_33 = arith.constant 0 : index
      %c0_34 = arith.constant 0 : index
      %70 = vector.load %arg9[%69, %c0_33, %c0_34] : memref<1x16x1xf32, #tpu.memory_space<vmem>>, vector<1x16x1xf32>
      %71 = vector.shape_cast %70 : vector<1x16x1xf32> to vector<16x1xf32>
      %72 = vector.shape_cast %68 : vector<16x1xf32> to vector<1x16x1xf32>
      tpu.vector_store %arg9[%69, %c0_33, %c0_34], %72 {strides = array<i32>} : memref<1x16x1xf32, #tpu.memory_space<vmem>>, vector<1x16x1xf32>,
    } else {
    }
    %c0 = arith.constant 0 : index
    %c0_1 = arith.constant 0 : index
    %3 = vector.load %arg2[%c0, %c0_1] : memref<16x32xbf16, #tpu.memory_space<vmem>>, vector<16x32xbf16>
    %c0_2 = arith.constant 0 : index
    %c0_3 = arith.constant 0 : index
    %4 = vector.load %arg3[%c0_2, %c0_3] : memref<32x128xbf16, #tpu.memory_space<vmem>>, vector<32x128xbf16>
    %cst = arith.constant dense<0.000000e+00> : vector<16x128xf32>
    %5 = tpu.matmul %3, %4, %cst {dimension_numbers = #tpu.dot_dimension_numbers<[1], [0], [0], [1], [0, 0, 1, 1], [], []>} : vector<16x32xbf16>, vector<32x128xbf16>, vector<16x128xf32> -> vector<16x128xf32>
    %6 = tpu.iota {dimensions = array<i32: 1>} : vector<1x128xi32>
    %7 = arith.index_cast %arg1 : i32 to index
    %c0_4 = arith.constant 0 : index
    %c0_5 = arith.constant 0 : index
    %8 = vector.load %arg7[%7, %c0_4, %c0_5] : memref<1x16x1xf32, #tpu.memory_space<vmem>>, vector<1x16x1xf32>
    %9 = vector.shape_cast %8 : vector<1x16x1xf32> to vector<16x1xf32>
    %cst_6 = arith.constant dense<0xFF800000> : vector<16xf32>
    %10 = vector.multi_reduction <maximumf>, %5, %cst_6 [1] : vector<16x128xf32> to vector<16xf32>
    %11 = vector.shape_cast %10 : vector<16xf32> to vector<16x1xf32>
    %12 = arith.maximumf %9, %11 : vector<16x1xf32>
    %13 = arith.subf %9, %12 : vector<16x1xf32>
    %14 = math.exp %13 : vector<16x1xf32>
    %15 = arith.index_cast %arg1 : i32 to index
    %c0_7 = arith.constant 0 : index
    %c0_8 = arith.constant 0 : index
    %16 = vector.load %arg8[%15, %c0_7, %c0_8] : memref<1x16x1xf32, #tpu.memory_space<vmem>>, vector<1x16x1xf32>
    %17 = vector.shape_cast %16 : vector<1x16x1xf32> to vector<16x1xf32>
    %18 = arith.mulf %14, %17 : vector<16x1xf32>
    %19 = vector.broadcast %12 : vector<16x1xf32> to vector<16x128xf32>
    %20 = arith.subf %5, %19 : vector<16x128xf32>
    %21 = math.exp %20 : vector<16x128xf32>
    %cst_9 = arith.constant dense<0.000000e+00> : vector<16xf32>
    %22 = vector.multi_reduction <add>, %21, %cst_9 [1] : vector<16x128xf32> to vector<16xf32>
    %23 = vector.shape_cast %22 : vector<16xf32> to vector<16x1xf32>
    %24 = arith.addf %18, %23 : vector<16x1xf32>
    %25 = arith.index_cast %arg1 : i32 to index
    %c0_10 = arith.constant 0 : index
    %c0_11 = arith.constant 0 : index
    %26 = vector.load %arg7[%25, %c0_10, %c0_11] : memref<1x16x1xf32, #tpu.memory_space<vmem>>, vector<1x16x1xf32>
    %27 = vector.shape_cast %26 : vector<1x16x1xf32> to vector<16x1xf32>
    %28 = vector.shape_cast %12 : vector<16x1xf32> to vector<1x16x1xf32>
    tpu.vector_store %arg7[%25, %c0_10, %c0_11], %28 {strides = array<i32>} : memref<1x16x1xf32, #tpu.memory_space<vmem>>, vector<1x16x1xf32>,
    %29 = arith.index_cast %arg1 : i32 to index
    %c0_12 = arith.constant 0 : index
    %c0_13 = arith.constant 0 : index
    %30 = vector.load %arg8[%29, %c0_12, %c0_13] : memref<1x16x1xf32, #tpu.memory_space<vmem>>, vector<1x16x1xf32>
    %31 = vector.shape_cast %30 : vector<1x16x1xf32> to vector<16x1xf32>
    %32 = vector.shape_cast %24 : vector<16x1xf32> to vector<1x16x1xf32>
    tpu.vector_store %arg8[%29, %c0_12, %c0_13], %32 {strides = array<i32>} : memref<1x16x1xf32, #tpu.memory_space<vmem>>, vector<1x16x1xf32>,
    %c0_14 = arith.constant 0 : index
    %c0_15 = arith.constant 0 : index
    %33 = vector.load %arg4[%c0_14, %c0_15] : memref<16x1xi32, #tpu.memory_space<vmem>>, vector<16x1xi32>
    %c128_i32 = arith.constant 128 : i32
    %34 = arith.muli %arg0, %c128_i32 : i32
    %35 = vector.broadcast %34 : i32 to vector<16x1xi32>
    %36 = arith.subi %33, %35 : vector<16x1xi32>
    %37 = arith.index_cast %arg1 : i32 to index
    %c0_16 = arith.constant 0 : index
    %c0_17 = arith.constant 0 : index
    %38 = vector.load %arg9[%37, %c0_16, %c0_17] : memref<1x16x1xf32, #tpu.memory_space<vmem>>, vector<1x16x1xf32>
    %39 = vector.shape_cast %38 : vector<1x16x1xf32> to vector<16x1xf32>
    %40 = vector.broadcast %6 : vector<1x128xi32> to vector<16x128xi32>
    %41 = vector.broadcast %36 : vector<16x1xi32> to vector<16x128xi32>
    %42 = arith.cmpi eq, %40, %41 : vector<16x128xi32>
    %cst_18 = arith.constant 0.000000e+00 : f32
    %43 = vector.broadcast %cst_18 : f32 to vector<16x128xf32>
    %44 = arith.select %42, %5, %43 : vector<16x128xi1>, vector<16x128xf32>
    %cst_19 = arith.constant dense<0.000000e+00> : vector<16xf32>
    %45 = vector.multi_reduction <add>, %44, %cst_19 [1] : vector<16x128xf32> to vector<16xf32>
    %46 = vector.shape_cast %45 : vector<16xf32> to vector<16x1xf32>
    %47 = arith.addf %39, %46 : vector<16x1xf32>
    %48 = arith.index_cast %arg1 : i32 to index
    %c0_20 = arith.constant 0 : index
    %c0_21 = arith.constant 0 : index
    %49 = vector.load %arg9[%48, %c0_20, %c0_21] : memref<1x16x1xf32, #tpu.memory_space<vmem>>, vector<1x16x1xf32>
    %50 = vector.shape_cast %49 : vector<1x16x1xf32> to vector<16x1xf32>
    %51 = vector.shape_cast %47 : vector<16x1xf32> to vector<1x16x1xf32>
    tpu.vector_store %arg9[%48, %c0_20, %c0_21], %51 {strides = array<i32>} : memref<1x16x1xf32, #tpu.memory_space<vmem>>, vector<1x16x1xf32>,
    %c0_22 = arith.constant 0 : index
    %c0_23 = arith.constant 0 : index
    %52 = vector.load %arg5[%c0_22, %c0_23] : memref<16x1xf32, #tpu.memory_space<vmem>>, vector<16x1xf32>
    %53 = arith.subf %47, %12 : vector<16x1xf32>
    %54 = math.log %24 : vector<16x1xf32>
    %55 = arith.subf %53, %54 : vector<16x1xf32>
    %56 = arith.mulf %52, %55 : vector<16x1xf32>
    %c0_24 = arith.constant 0 : index
    %c0_25 = arith.constant 0 : index
    %57 = vector.load %arg6[%c0_24, %c0_25] : memref<16x1xf32, #tpu.memory_space<vmem>>, vector<16x1xf32>
    tpu.vector_store %arg6[%c0_24, %c0_25], %56 {strides = array<i32>} : memref<16x1xf32, #tpu.memory_space<vmem>>, vector<16x1xf32>,
    return
  }
  func.func @transform_0(%arg0: i32, %arg1: i32) -> (i32, i32) {
    %c0_i32 = arith.constant 0 : i32
    %c0_i32_0 = arith.constant 0 : i32
    return %arg1, %c0_i32 : i32, i32
  }
  func.func @transform_1(%arg0: i32, %arg1: i32) -> (i32, i32) {
    %c0_i32 = arith.constant 0 : i32
    %c0_i32_0 = arith.constant 0 : i32
    return %c0_i32, %arg0 : i32, i32
  }
  func.func @transform_2(%arg0: i32, %arg1: i32) -> (i32, i32) {
    %c0_i32 = arith.constant 0 : i32
    %c0_i32_0 = arith.constant 0 : i32
    return %arg1, %c0_i32 : i32, i32
  }
  func.func @transform_3(%arg0: i32, %arg1: i32) -> (i32, i32) {
    %c0_i32 = arith.constant 0 : i32
    %c0_i32_0 = arith.constant 0 : i32
    return %arg1, %c0_i32 : i32, i32
  }
  func.func @transform_4(%arg0: i32, %arg1: i32) -> (i32, i32) {
    %c0_i32 = arith.constant 0 : i32
    %c0_i32_0 = arith.constant 0 : i32
    return %arg1, %c0_i32 : i32, i32
  }
}

</mosaic_0001>

<llo_original>
// kernel: tpu_custom_call.1
$region0: #{tpu_custom_call.1}
  #allocation0 [shape = 'u32[]', space=smem, size = 0x4, offset = 0x4, fixed_abs, tag = 'smem constant byte address 0x4 - core index']
  #allocation1 [shape = 'u32[144,128]{1,0:T(1,128)}', space=vmem, size = 0x12000, scoped, tag = 'internal scratch']
  #allocation2 [shape = 'f32[1,16,1]{2,1,0:T(8,128)}', space=vmem, size = 0x2000, scoped, tag = 'scratch operand']
  #allocation3 [shape = 'f32[1,16,1]{2,1,0:T(8,128)}', space=vmem, size = 0x2000, scoped, tag = 'scratch operand']
  #allocation4 [shape = 'f32[1,16,1]{2,1,0:T(8,128)}', space=vmem, size = 0x2000, scoped, tag = 'scratch operand']
  %s0 = inlined_call_operand.vmem [shape: bf16[16,32], index: 0, kind: input, shape index: {}]
  %s1 = inlined_call_operand.vmem [shape: bf16[32,128], index: 1, kind: input, shape index: {}]
  %s2 = inlined_call_operand.vmem [shape: s32[16,1], index: 2, kind: input, shape index: {}]
  %s3 = inlined_call_operand.vmem [shape: f32[16,1], index: 3, kind: input, shape index: {}]
  %s4 = inlined_call_operand.vmem [shape: f32[16,1], index: 4, kind: output, shape index: {}]
  %s5 = sld [smem:[#allocation0]]
  $region30: #{tpu_custom_call.1} parent=0
    _
  %s7 = ssub.s32 1, %s5
  %s8 = scalar_select 0, %s7, %s5
  // Predicated region
  $region2: #{tpu_custom_call.1} parent=0 // pred_check
    _
  $region3: #{tpu_custom_call.1} parent=0 // pred_check_branch
    %10 = sbr.rel (0) target = $region5
  $region4: #{tpu_custom_call.1} parent=0 // pred_region
    _
  $region5: #{tpu_custom_call.1} parent=0 // pred_fallthru
    _
  // Predicated region
  $region6: #{tpu_custom_call.1} parent=0 // pred_check
    _
  $region7: #{tpu_custom_call.1} parent=0 // pred_check_branch
    %12 = sbr.rel (0) target = $region9
  $region8: #{tpu_custom_call.1} parent=0 // pred_region
    _
  $region9: #{tpu_custom_call.1} parent=0 // pred_fallthru
    _
  // Predicated region
  $region10: #{tpu_custom_call.1} parent=0 // pred_check
    _
  $region11: #{tpu_custom_call.1} parent=0 // pred_check_branch
    %14 = sbr.rel (0) target = $region13
  $region12: #{tpu_custom_call.1} parent=0 // pred_region
    _
  $region13: #{tpu_custom_call.1} parent=0 // pred_fallthru
    _
  // Predicated region
  $region14: #{tpu_custom_call.1} parent=0 // pred_check
    _
  $region15: #{tpu_custom_call.1} parent=0 // pred_check_branch
    %16 = sbr.rel (0) target = $region17
  $region16: #{tpu_custom_call.1} parent=0 // pred_region
    _
  $region17: #{tpu_custom_call.1} parent=0 // pred_fallthru
    _
  %p18 = scmp.eq.s32.totalorder 0, 0
  // Predicated region
  $region18: #{tpu_custom_call.1} parent=0 // pred_check
    %p19 = pneg %p18
  $region19: #{tpu_custom_call.1} parent=0 // pred_check_branch
    %21 = sbr.rel (%p19) target = $region21
  $region20: #{tpu_custom_call.1} parent=0 // pred_region
    %s22 = smul.u32 0, 16
    %s23 = scalar_lea.vmem [#allocation2], %s22
    %vm24 = vcmask 7168
    %25 = vst.msk [vmem:[%s23] sm:$0xff] %vm24, -inf
    %26 = vst.msk [vmem:[%s23 + $0x8] sm:$0xff] %vm24, -inf
    %s27 = scalar_lea.vmem [#allocation3], %s22
    %28 = vst.msk [vmem:[%s27] sm:$0xff] %vm24, 0.0
    %29 = vst.msk [vmem:[%s27 + $0x8] sm:$0xff] %vm24, 0.0
    %s30 = scalar_lea.vmem [#allocation4], %s22
    %31 = vst.msk [vmem:[%s30] sm:$0xff] %vm24, 0.0
    %32 = vst.msk [vmem:[%s30 + $0x8] sm:$0xff] %vm24, 0.0
  $region21: #{tpu_custom_call.1} parent=0 // pred_fallthru
    _
  %v33 = vld [vmem:[%s0] sm:$0xf]
  %v34 = vld [vmem:[%s0 + $0x4] sm:$0xf]
  %v35 = vld [vmem:[%s1] sm:$0xf]
  %v36 = vld [vmem:[%s1 + $0x4] sm:$0xf]
  %v37 = vld [vmem:[%s1 + $0x8] sm:$0xf]
  %v38 = vld [vmem:[%s1 + $0xc] sm:$0xf]
  %v41 = vunpack.c.l.b16 %v33
  %v42 = vunpack.c.l.b16 %v34
  %v43 = vpack.c.b16 %v42, %v41
  %v48 = vunpack.c.l.b16 %v35
  %v49 = vunpack.c.l.b16 %v36
  %v50 = vunpack.c.l.b16 %v37
  %v51 = vunpack.c.l.b16 %v38
  %v52 = vpack.c.b16 %v49, %v48
  %v53 = vpack.c.b16 %v51, %v50
  %vm56 = vcmask 261120
  %v58 = vsel %vm56, %v43, 0
  %60 = vmatprep.subr.bf16.mxu0 0
  %61 = vmatpush1.bf16.msra.mxu0 0
  %62 = vmatprep.subr.bf16.mxu0 0
  %63 = vmatpush1.bf16.msra.mxu0 0
  %64 = vmatprep.subr.bf16.mxu0 0
  %65 = vmatpush1.bf16.msra.mxu0 0
  %66 = vmatprep.subr.bf16.mxu0 0
  %67 = vmatpush1.bf16.msra.mxu0 0
  %68 = vmatprep.subr.bf16.mxu0 0
  %69 = vmatpush1.bf16.msra.mxu0 0
  %70 = vmatprep.subr.bf16.mxu0 0
  %71 = vmatpush1.bf16.msra.mxu0 0
  %72 = vmatprep.subr.bf16.mxu0 0
  %73 = vmatpush1.bf16.msra.mxu0 %v53
  %74 = vmatprep.subr.bf16.mxu0 0
  %75 = vmatpush1.bf16.msra.mxu0 %v52
  %76 = vmatprep.subr.bf16.mxu0 0
  %77 = vmatpush2.bf16.msra.mxu0 0
  %78 = vmatprep.subr.bf16.mxu0 0
  %79 = vmatpush2.bf16.msra.mxu0 0
  %80 = vmatprep.subr.bf16.mxu0 0
  %81 = vmatpush2.bf16.msra.mxu0 0
  %82 = vmatprep.subr.bf16.mxu0 0
  %83 = vmatpush2.bf16.msra.mxu0 0
  %84 = vmatprep.subr.bf16.mxu0 0
  %85 = vmatpush2.bf16.msra.mxu0 0
  %86 = vmatprep.subr.bf16.mxu0 0
  %87 = vmatpush2.bf16.msra.mxu0 0
  %88 = vmatprep.subr.bf16.mxu0 0
  %89 = vmatpush2.bf16.msra.mxu0 0
  %90 = vmatprep.subr.bf16.mxu0 0
  %91 = vmatpush2.bf16.msra.mxu0 0
  %92 = vmatprep.mubr.bf16.mxu0 0
  %93 = vmatmul.mubr.bf16.gmra.mxu0 %v58
  %v94 = vpop.f32.mrf.mxu0
  %v95 = vadd.f32 0.0, %v94
  %v96 = vpop.f32.mrf.mxu0
  %v97 = vpop.f32.mrf.mxu0
  %v98 = vadd.f32 0.0, %v97
  %v99 = vpop.f32.mrf.mxu0
  %100 = vdwg.mxu0
  %v101 = vlaneseq
  %v102 = vand.u32 %v101, 127
  %s103 = smul.u32 0, 16
  %s104 = scalar_lea.vmem [#allocation2], %s103
  %v105 = vld [vmem:[%s104] sm:$0xff]
  %v106 = vld [vmem:[%s104 + $0x8] sm:$0xff]
  %107 = vmax.xlane.f32.xlu0 %v95
  %v108 = vpop.xlane.xlu0 %107
  %109 = vmax.xlane.f32.xlu0 %v98
  %v110 = vpop.xlane.xlu0 %109
  %v111 = vmax.f32 %v105, %v108
  %v112 = vmax.f32 %v106, %v110
  %v113 = vsub.f32 %v105, %v111
  %v114 = vsub.f32 %v106, %v112
  %v115 = vmul.f32 %v113, 1.442695
  %v116 = vpow.pop %v115
  %v117 = vmul.f32 %v114, 1.442695
  %v118 = vpow.pop %v117
  %s119 = scalar_lea.vmem [#allocation3], %s103
  %v120 = vld [vmem:[%s119] sm:$0xff]
  %v121 = vld [vmem:[%s119 + $0x8] sm:$0xff]
  %v122 = vmul.f32 %v116, %v120
  %v123 = vmul.f32 %v118, %v121
  %125 = vset.pattern.permute.xlu0 0
  %126 = vperm.xlu0 %125, %v111
  %v127 = vpop.permute.xlu0 %126
  %130 = vset.pattern.permute.xlu0 0
  %131 = vperm.xlu0 %130, %v112
  %v132 = vpop.permute.xlu0 %131
  %v134 = vsub.f32 %v95, %v127
  %v135 = vsub.f32 %v98, %v132
  %v136 = vmul.f32 %v134, 1.442695
  %v137 = vpow.pop %v136
  %v138 = vmul.f32 %v135, 1.442695
  %v139 = vpow.pop %v138
  %140 = vadd.xlane.f32.xlu0 %v137
  %v141 = vpop.xlane.xlu0 %140
  %142 = vadd.xlane.f32.xlu0 %v139
  %v143 = vpop.xlane.xlu0 %142
  %v144 = vadd.f32 %v122, %v141
  %v145 = vadd.f32 %v123, %v143
  %vm146 = vcmask 7168
  %147 = vst.msk [vmem:[%s104] sm:$0xff] %vm146, %v111
  %148 = vst.msk [vmem:[%s104 + $0x8] sm:$0xff] %vm146, %v112
  %149 = vst.msk [vmem:[%s119] sm:$0xff] %vm146, %v144
  %150 = vst.msk [vmem:[%s119 + $0x8] sm:$0xff] %vm146, %v145
  %v151 = vld [vmem:[%s2] sm:$0xff]
  %v152 = vld [vmem:[%s2 + $0x8] sm:$0xff]
  %s153 = smul.u32 0, 128
  %v154 = vstv %s153
  %v155 = vsub.s32 %v151, %v154
  %v156 = vsub.s32 %v152, %v154
  %s157 = scalar_lea.vmem [#allocation4], %s103
  %v158 = vld [vmem:[%s157] sm:$0xff]
  %v159 = vld [vmem:[%s157 + $0x8] sm:$0xff]
  %160 = vset.pattern.permute.xlu0 0
  %161 = vperm.xlu0 %160, %v155
  %v162 = vpop.permute.xlu0 %161
  %163 = vset.pattern.permute.xlu0 0
  %164 = vperm.xlu0 %163, %v156
  %v165 = vpop.permute.xlu0 %164
  %vm166 = vcmp.eq.s32.totalorder %v102, %v162
  %vm167 = vcmp.eq.s32.totalorder %v102, %v165
  %v168 = vsel %vm166, %v95, 0.0
  %v169 = vsel %vm167, %v98, 0.0
  %170 = vadd.xlane.f32.xlu0 %v168
  %v171 = vpop.xlane.xlu0 %170
  %172 = vadd.xlane.f32.xlu0 %v169
  %v173 = vpop.xlane.xlu0 %172
  %v174 = vadd.f32 %v158, %v171
  %v175 = vadd.f32 %v159, %v173
  %176 = vst.msk [vmem:[%s157] sm:$0xff] %vm146, %v174
  %177 = vst.msk [vmem:[%s157 + $0x8] sm:$0xff] %vm146, %v175
  %v178 = vld [vmem:[%s3] sm:$0xff]
  %v179 = vld [vmem:[%s3 + $0x8] sm:$0xff]
  %v180 = vsub.f32 %v174, %v111
  %v181 = vsub.f32 %v175, %v112
  %v182 = vlog2.pop %v144
  %v183 = vmul.f32 %v182, 0.6931472
  %v184 = vlog2.pop %v145
  %v185 = vmul.f32 %v184, 0.6931472
  %v186 = vsub.f32 %v180, %v183
  %v187 = vsub.f32 %v181, %v185
  %v188 = vmul.f32 %v178, %v186
  %v189 = vmul.f32 %v179, %v187
  %190 = vst.msk [vmem:[%s4] sm:$0xff] %vm146, %v188
  %191 = vst.msk [vmem:[%s4 + $0x8] sm:$0xff] %vm146, %v189
  // Predicated region
  $region22: #{tpu_custom_call.1} parent=0 // pred_check
    _
  $region23: #{tpu_custom_call.1} parent=0 // pred_check_branch
    %193 = sbr.rel (0) target = $region25
  $region24: #{tpu_custom_call.1} parent=0 // pred_region
    _
  $region25: #{tpu_custom_call.1} parent=0 // pred_fallthru
    _
  // Predicated region
  $region26: #{tpu_custom_call.1} parent=0 // pred_check
    _
  $region27: #{tpu_custom_call.1} parent=0 // pred_check_branch
    %195 = sbr.rel (0) target = $region29
  $region28: #{tpu_custom_call.1} parent=0 // pred_region
    _
  $region29: #{tpu_custom_call.1} parent=0 // pred_fallthru
    _

</llo_original>
